<compile_context>
chip_gen: v6e
topology: v6e:2x2x1
jax: 0.10.0
libtpu: 0.0.40
codegen_flags: <defaults>
</compile_context>

<pallas_src>
import functools

import jax
import jax.numpy as jnp
from jax import lax
from jax.experimental import pallas as pl
from jax.experimental.pallas import tpu as pltpu

HIDDEN = 64
LANE = 128  # TPU lane width; batch tiles live on the lane axis.


# ----------------------------------------------------------------------------
# Kernel math (feature-major: x is (n, TB), weights are (out_feat, in_feat))
# ----------------------------------------------------------------------------
def _broadcast_biases(b1, b2, b3, tb):
    # Hoisted: JAX does not CSE broadcast_in_dim, so do it once per kernel
    # instead of once per RK4 stage.
    return (jnp.broadcast_to(b1, (b1.shape[0], tb)),
            jnp.broadcast_to(b2, (b2.shape[0], tb)),
            jnp.broadcast_to(b3, (b3.shape[0], tb)))


def _mlp(x, w1, b1b, w2, b2b, w3, b3b):
    # TODO(synk): optional bf16 hidden path (cast h1/h2 + weights to bf16) on
    # v6e/v7x for ~2x EUP tanh throughput; kept f32 for parity with the ref.
    h1 = jnp.tanh(jnp.dot(w1, x, preferred_element_type=jnp.float32) + b1b)   # (64, TB)
    h2 = jnp.tanh(jnp.dot(w2, h1, preferred_element_type=jnp.float32) + b2b)  # (64, TB)
    return jnp.dot(w3, h2, preferred_element_type=jnp.float32) + b3b          # (n,  TB)


def _odefunc_kernel(x_ref, w1_ref, b1_ref, w2_ref, b2_ref, w3_ref, b3_ref, o_ref):
    tb = x_ref.shape[-1]
    b1b, b2b, b3b = _broadcast_biases(b1_ref[...], b2_ref[...], b3_ref[...], tb)
    out = _mlp(x_ref[...], w1_ref[...], b1b, w2_ref[...], b2b, w3_ref[...], b3b)
    o_ref[...] = out.astype(o_ref.dtype)


def _rk4_traj_kernel(dt_ref, x_ref, w1_ref, b1_ref, w2_ref, b2_ref, w3_ref, b3_ref,
                     o_ref, *, num_steps):
    """num_steps RK4 steps of dy/dt = net(y), fully fused in one kernel body."""
    tb = x_ref.shape[-1]
    dt = dt_ref[0]                       # scalar read from SMEM
    w1, w2, w3 = w1_ref[...], w2_ref[...], w3_ref[...]
    b1b, b2b, b3b = _broadcast_biases(b1_ref[...], b2_ref[...], b3_ref[...], tb)
    f = lambda y: _mlp(y, w1, b1b, w2, b2b, w3, b3b)

    def step(_, y):
        k1 = f(y)
        k2 = f(y + (0.5 * dt) * k1)
        k3 = f(y + (0.5 * dt) * k2)
        k4 = f(y + dt * k3)
        return y + (dt / 6.0) * (k1 + 2.0 * k2 + 2.0 * k3 + k4)

    y_final = lax.fori_loop(0, num_steps, step, x_ref[...].astype(jnp.float32))
    o_ref[...] = y_final.astype(o_ref.dtype)


# ----------------------------------------------------------------------------
# Launch plumbing
# ----------------------------------------------------------------------------
def _pick_tile(B, batch_tile):
    """Batch tile on the lane axis: multiple of 128, capped by batch_tile, and
    split into >=2 tiles whenever the padded batch allows so the "parallel"
    grid axis can shard across both TensorCores on v7x."""
    batch_tile = max(LANE, (int(batch_tile) // LANE) * LANE)
    lanes = pl.cdiv(B, LANE)                       # padded batch, in 128-lane units
    tb = min(batch_tile, lanes * LANE)
    if lanes >= 2 and lanes * LANE <= tb:          # would collapse to one tile
        tb = pl.cdiv(lanes, 2) * LANE
    num_tiles = pl.cdiv(B, tb)
    return tb, num_tiles


def _to_feature_major(y, tb, num_tiles):
    """(B, n) -> zero-padded (n, num_tiles*tb); done once per call (once per
    whole trajectory for odeint_rk4).  Padded columns are zeros: they flow
    through the net (wasted lanes, never NaN) and are sliced off at the end."""
    B, n = y.shape
    Bp = num_tiles * tb
    return jnp.zeros((n, Bp), y.dtype).at[:, :B].set(y.T)


def _const_spec(shape):
    # Constant block index => DMA'd once, VMEM-resident across all batch tiles.
    return pl.BlockSpec(shape, lambda i: (0, 0))


def _split_params(params):
    return (params["w1"], params["b1"].reshape(-1, 1),
            params["w2"], params["b2"].reshape(-1, 1),
            params["w3"], params["b3"].reshape(-1, 1))


@functools.partial(jax.jit, static_argnames=("batch_tile",))
def odefunc_forward(t, y, params, *, batch_tile=256):
    """Pallas-backed ODEFunc.forward(t, y) == net(y).  y: (B, n) float32."""
    del t  # ODEFunc ignores t
    B, n = y.shape
    tb, num_tiles = _pick_tile(B, batch_tile)
    x = _to_feature_major(y, tb, num_tiles)
    w1, b1, w2, b2, w3, b3 = _split_params(params)

    out = pl.pallas_call(
        _odefunc_kernel,
        out_shape=jax.ShapeDtypeStruct(x.shape, x.dtype),
        grid=(num_tiles,),
        in_specs=[
            pl.BlockSpec((n, tb), lambda i: (0, i)),        # activations, lane-tiled
            _const_spec(w1.shape), _const_spec(b1.shape),
            _const_spec(w2.shape), _const_spec(b2.shape),
            _const_spec(w3.shape), _const_spec(b3.shape),
        ],
        out_specs=pl.BlockSpec((n, tb), lambda i: (0, i)),
        compiler_params=pltpu.CompilerParams(dimension_semantics=("parallel",)),
    )(x, w1, b1, w2, b2, w3, b3)
    return out[:, :B].T


@functools.partial(jax.jit, static_argnames=("num_steps", "batch_tile"))
def odeint_rk4(y0, dt, params, *, num_steps, batch_tile=128):
    """Integrate dy/dt = net(y) for num_steps explicit-RK4 steps in ONE
    pallas_call; state stays feature-major in VMEM, weights read once,
    state buffer aliased to the output."""
    B, n = y0.shape
    tb, num_tiles = _pick_tile(B, batch_tile)
    x = _to_feature_major(y0, tb, num_tiles)
    dt_arr = jnp.asarray(dt, jnp.float32).reshape(1)        # scalar operand -> SMEM
    w1, b1, w2, b2, w3, b3 = _split_params(params)

    kernel = functools.partial(_rk4_traj_kernel, num_steps=int(num_steps))
    out = pl.pallas_call(
        kernel,
        out_shape=jax.ShapeDtypeStruct(x.shape, x.dtype),
        grid=(num_tiles,),
        in_specs=[
            pl.BlockSpec(memory_space=pltpu.MemorySpace.SMEM),  # dt scalar
            pl.BlockSpec((n, tb), lambda i: (0, i)),            # state, lane-tiled
            _const_spec(w1.shape), _const_spec(b1.shape),
            _const_spec(w2.shape), _const_spec(b2.shape),
            _const_spec(w3.shape), _const_spec(b3.shape),
        ],
        out_specs=pl.BlockSpec((n, tb), lambda i: (0, i)),
        input_output_aliases={1: 0},                            # in-place state update
        compiler_params=pltpu.CompilerParams(dimension_semantics=("parallel",)),
    )(dt_arr, x, w1, b1, w2, b2, w3, b3)
    return out[:, :B].T


def rk4_step(t, y, dt, params, *, batch_tile=128):
    """One explicit RK4 step (same fused kernel with num_steps=1)."""
    del t  # autonomous system
    return odeint_rk4(y, dt, params, num_steps=1, batch_tile=batch_tile)


# ----------------------------------------------------------------------------
# Params / pure-JAX references
# ----------------------------------------------------------------------------
def init_params(key, n, hidden=HIDDEN, dtype=jnp.float32):
    """PyTorch nn.Linear-style init; weights stored as (out_features, in_features)."""
    keys = jax.random.split(key, 6)

    def linear(kw, kb, fan_in, fan_out):
        bound = 1.0 / jnp.sqrt(jnp.array(fan_in, dtype))
        w = jax.random.uniform(kw, (fan_out, fan_in), dtype, -bound, bound)
        b = jax.random.uniform(kb, (fan_out,), dtype, -bound, bound)
        return w, b

    w1, b1 = linear(keys[0], keys[1], n, hidden)
    w2, b2 = linear(keys[2], keys[3], hidden, hidden)
    w3, b3 = linear(keys[4], keys[5], hidden, n)
    return {"w1": w1, "b1": b1, "w2": w2, "b2": b2, "w3": w3, "b3": b3}


def odefunc_ref(t, y, p):
    del t
    h1 = jnp.tanh(y @ p["w1"].T + p["b1"])
    h2 = jnp.tanh(h1 @ p["w2"].T + p["b2"])
    return h2 @ p["w3"].T + p["b3"]


def rk4_step_ref(t, y, dt, p):
    f = lambda y_: odefunc_ref(t, y_, p)
    k1 = f(y)
    k2 = f(y + 0.5 * dt * k1)
    k3 = f(y + 0.5 * dt * k2)
    k4 = f(y + dt * k3)
    return y + (dt / 6.0) * (k1 + 2.0 * k2 + 2.0 * k3 + k4)


# ----------------------------------------------------------------------------
if __name__ == "__main__":
    key = jax.random.PRNGKey(0)
    k_param, k_y, k_y2 = jax.random.split(key, 3)

    n = 4
    params = init_params(k_param, n)
    t = jnp.float32(0.0)  # unused by ODEFunc

    # Forward, small batch (single 128-lane tile).
    y = jax.random.normal(k_y, (8, n), dtype=jnp.float32)
    out = jax.block_until_ready(odefunc_forward(t, y, params))
    ref = odefunc_ref(t, y, params)
    assert out.shape == (8, n)
    assert jnp.allclose(out, ref, atol=1e-5, rtol=1e-5), "forward mismatch (B=8)"

    # Forward, multiple batch tiles + padding (grid=(3,), tb=128).
    y2 = jax.random.normal(k_y2, (300, n), dtype=jnp.float32)
    out2 = jax.block_until_ready(odefunc_forward(t, y2, params, batch_tile=128))
    ref2 = odefunc_ref(t, y2, params)
    assert out2.shape == (300, n)
    assert jnp.allclose(out2, ref2, atol=1e-5, rtol=1e-5), "forward mismatch (B=300)"

    # Fused multi-step RK4 trajectory: 25 steps in one pallas_call.
    dt = jnp.float32(0.05)
    num_steps = 25
    y_T = jax.block_until_ready(odeint_rk4(y, dt, params, num_steps=num_steps))
    y_ref = y
    for _ in range(num_steps):
        y_ref = rk4_step_ref(t, y_ref, dt, params)
    assert y_T.shape == (8, n)
    assert jnp.allclose(y_T, y_ref, atol=1e-3, rtol=1e-3), "fused rk4 trajectory mismatch"

    # Single-step API (num_steps=1 through the same fused kernel).
    y1 = jax.block_until_ready(rk4_step(t, y, dt, params))
    y1_ref = rk4_step_ref(t, y, dt, params)
    assert jnp.allclose(y1, y1_ref, atol=1e-4, rtol=1e-4), "rk4 single-step mismatch"

    print("KERNEL_OK")
</pallas_src>

<mosaic_0001>
module attributes {stable_mosaic.version = 11 : i64} {
  func.func @_odefunc_kernel(%arg0: i32, %arg1: memref<4x128xf32, #tpu.memory_space<vmem>>, %arg2: memref<64x4xf32, #tpu.memory_space<vmem>>, %arg3: memref<64x1xf32, #tpu.memory_space<vmem>>, %arg4: memref<64x64xf32, #tpu.memory_space<vmem>>, %arg5: memref<64x1xf32, #tpu.memory_space<vmem>>, %arg6: memref<4x64xf32, #tpu.memory_space<vmem>>, %arg7: memref<4x1xf32, #tpu.memory_space<vmem>>, %arg8: memref<4x128xf32, #tpu.memory_space<vmem>>) attributes {dimension_semantics = [#tpu.dimension_semantics<parallel>], iteration_bounds = array<i64: 1>, scalar_prefetch = 0 : i64, scratch_operands = 0 : i64, tpu.core_type = #tpu.core_type<tc>, window_params = [{transform_indices = @transform_0, window_bounds = array<i64: 4, 128>}, {pipeline_mode = #tpu.pipeline_mode<synchronous>, transform_indices = @transform_1, window_bounds = array<i64: 64, 4>}, {pipeline_mode = #tpu.pipeline_mode<synchronous>, transform_indices = @transform_2, window_bounds = array<i64: 64, 1>}, {pipeline_mode = #tpu.pipeline_mode<synchronous>, transform_indices = @transform_3, window_bounds = array<i64: 64, 64>}, {pipeline_mode = #tpu.pipeline_mode<synchronous>, transform_indices = @transform_4, window_bounds = array<i64: 64, 1>}, {pipeline_mode = #tpu.pipeline_mode<synchronous>, transform_indices = @transform_5, window_bounds = array<i64: 4, 64>}, {pipeline_mode = #tpu.pipeline_mode<synchronous>, transform_indices = @transform_6, window_bounds = array<i64: 4, 1>}, {transform_indices = @transform_7, window_bounds = array<i64: 4, 128>}]} {
    %c0 = arith.constant 0 : index
    %c0_0 = arith.constant 0 : index
    %0 = vector.load %arg3[%c0, %c0_0] : memref<64x1xf32, #tpu.memory_space<vmem>>, vector<64x1xf32>
    %c0_1 = arith.constant 0 : index
    %c0_2 = arith.constant 0 : index
    %1 = vector.load %arg5[%c0_1, %c0_2] : memref<64x1xf32, #tpu.memory_space<vmem>>, vector<64x1xf32>
    %c0_3 = arith.constant 0 : index
    %c0_4 = arith.constant 0 : index
    %2 = vector.load %arg7[%c0_3, %c0_4] : memref<4x1xf32, #tpu.memory_space<vmem>>, vector<4x1xf32>
    %3 = vector.shape_cast %0 : vector<64x1xf32> to vector<64x1xf32>
    %4 = vector.broadcast %3 : vector<64x1xf32> to vector<64x128xf32>
    %5 = vector.shape_cast %1 : vector<64x1xf32> to vector<64x1xf32>
    %6 = vector.broadcast %5 : vector<64x1xf32> to vector<64x128xf32>
    %7 = vector.shape_cast %2 : vector<4x1xf32> to vector<4x1xf32>
    %8 = vector.broadcast %7 : vector<4x1xf32> to vector<4x128xf32>
    %c0_5 = arith.constant 0 : index
    %c0_6 = arith.constant 0 : index
    %9 = vector.load %arg1[%c0_5, %c0_6] : memref<4x128xf32, #tpu.memory_space<vmem>>, vector<4x128xf32>
    %c0_7 = arith.constant 0 : index
    %c0_8 = arith.constant 0 : index
    %10 = vector.load %arg2[%c0_7, %c0_8] : memref<64x4xf32, #tpu.memory_space<vmem>>, vector<64x4xf32>
    %c0_9 = arith.constant 0 : index
    %c0_10 = arith.constant 0 : index
    %11 = vector.load %arg4[%c0_9, %c0_10] : memref<64x64xf32, #tpu.memory_space<vmem>>, vector<64x64xf32>
    %c0_11 = arith.constant 0 : index
    %c0_12 = arith.constant 0 : index
    %12 = vector.load %arg6[%c0_11, %c0_12] : memref<4x64xf32, #tpu.memory_space<vmem>>, vector<4x64xf32>
    %cst = arith.constant dense<0.000000e+00> : vector<64x128xf32>
    %13 = tpu.matmul %10, %9, %cst {dimension_numbers = #tpu.dot_dimension_numbers<[1], [0], [0], [1], [0, 0, 1, 1], [], []>} : vector<64x4xf32>, vector<4x128xf32>, vector<64x128xf32> -> vector<64x128xf32>
    %14 = arith.addf %13, %4 : vector<64x128xf32>
    %15 = math.tanh %14 : vector<64x128xf32>
    %cst_13 = arith.constant dense<0.000000e+00> : vector<64x128xf32>
    %16 = tpu.matmul %11, %15, %cst_13 {dimension_numbers = #tpu.dot_dimension_numbers<[1], [0], [0], [1], [0, 0, 1, 1], [], []>} : vector<64x64xf32>, vector<64x128xf32>, vector<64x128xf32> -> vector<64x128xf32>
    %17 = arith.addf %16, %6 : vector<64x128xf32>
    %18 = math.tanh %17 : vector<64x128xf32>
    %cst_14 = arith.constant dense<0.000000e+00> : vector<4x128xf32>
    %19 = tpu.matmul %12, %18, %cst_14 {dimension_numbers = #tpu.dot_dimension_numbers<[1], [0], [0], [1], [0, 0, 1, 1], [], []>} : vector<4x64xf32>, vector<64x128xf32>, vector<4x128xf32> -> vector<4x128xf32>
    %20 = arith.addf %19, %8 : vector<4x128xf32>
    %c0_15 = arith.constant 0 : index
    %c0_16 = arith.constant 0 : index
    %21 = vector.load %arg8[%c0_15, %c0_16] : memref<4x128xf32, #tpu.memory_space<vmem>>, vector<4x128xf32>
    tpu.vector_store %arg8[%c0_15, %c0_16], %20 {strides = array<i32>} : memref<4x128xf32, #tpu.memory_space<vmem>>, vector<4x128xf32>,
    return
  }
  func.func @transform_0(%arg0: i32) -> (i32, i32) {
    %c0_i32 = arith.constant 0 : i32
    %c0_i32_0 = arith.constant 0 : i32
    return %c0_i32, %arg0 : i32, i32
  }
  func.func @transform_1(%arg0: i32) -> (i32, i32) {
    %c0_i32 = arith.constant 0 : i32
    %c0_i32_0 = arith.constant 0 : i32
    %c0_i32_1 = arith.constant 0 : i32
    return %c0_i32, %c0_i32_0 : i32, i32
  }
  func.func @transform_2(%arg0: i32) -> (i32, i32) {
    %c0_i32 = arith.constant 0 : i32
    %c0_i32_0 = arith.constant 0 : i32
    %c0_i32_1 = arith.constant 0 : i32
    return %c0_i32, %c0_i32_0 : i32, i32
  }
  func.func @transform_3(%arg0: i32) -> (i32, i32) {
    %c0_i32 = arith.constant 0 : i32
    %c0_i32_0 = arith.constant 0 : i32
    %c0_i32_1 = arith.constant 0 : i32
    return %c0_i32, %c0_i32_0 : i32, i32
  }
  func.func @transform_4(%arg0: i32) -> (i32, i32) {
    %c0_i32 = arith.constant 0 : i32
    %c0_i32_0 = arith.constant 0 : i32
    %c0_i32_1 = arith.constant 0 : i32
    return %c0_i32, %c0_i32_0 : i32, i32
  }
  func.func @transform_5(%arg0: i32) -> (i32, i32) {
    %c0_i32 = arith.constant 0 : i32
    %c0_i32_0 = arith.constant 0 : i32
    %c0_i32_1 = arith.constant 0 : i32
    return %c0_i32, %c0_i32_0 : i32, i32
  }
  func.func @transform_6(%arg0: i32) -> (i32, i32) {
    %c0_i32 = arith.constant 0 : i32
    %c0_i32_0 = arith.constant 0 : i32
    %c0_i32_1 = arith.constant 0 : i32
    return %c0_i32, %c0_i32_0 : i32, i32
  }
  func.func @transform_7(%arg0: i32) -> (i32, i32) {
    %c0_i32 = arith.constant 0 : i32
    %c0_i32_0 = arith.constant 0 : i32
    return %c0_i32, %arg0 : i32, i32
  }
}

</mosaic_0001>

<llo_original>
// kernel: odefunc_forward.1
$region0: #{odefunc_forward.1}
  #allocation0 [shape = 'u32[]', space=smem, size = 0x4, offset = 0x4, fixed_abs, tag = 'smem constant byte address 0x4 - core index']
  #allocation1 [shape = 'u32[144,128]{1,0:T(1,128)}', space=vmem, size = 0x12000, scoped, tag = 'internal scratch']
  %s0 = inlined_call_operand.vmem [shape: f32[4,128], index: 0, kind: input, shape index: {}]
  %s1 = inlined_call_operand.vmem [shape: f32[64,4], index: 1, kind: input, shape index: {}]
  %s2 = inlined_call_operand.vmem [shape: f32[64,1], index: 2, kind: input, shape index: {}]
  %s3 = inlined_call_operand.vmem [shape: f32[64,64], index: 3, kind: input, shape index: {}]
  %s4 = inlined_call_operand.vmem [shape: f32[64,1], index: 4, kind: input, shape index: {}]
  %s5 = inlined_call_operand.vmem [shape: f32[4,64], index: 5, kind: input, shape index: {}]
  %s6 = inlined_call_operand.vmem [shape: f32[4,1], index: 6, kind: input, shape index: {}]
  %s7 = inlined_call_operand.vmem [shape: f32[4,128], index: 7, kind: output, shape index: {}]
  %s8 = sld [smem:[#allocation0]]
  $region38: #{odefunc_forward.1} parent=0
    _
  %s10 = ssub.s32 1, %s8
  %s11 = scalar_select 0, %s10, %s8
  // Predicated region
  $region2: #{odefunc_forward.1} parent=0 // pred_check
    _
  $region3: #{odefunc_forward.1} parent=0 // pred_check_branch
    %13 = sbr.rel (0) target = $region5
  $region4: #{odefunc_forward.1} parent=0 // pred_region
    _
  $region5: #{odefunc_forward.1} parent=0 // pred_fallthru
    _
  // Predicated region
  $region6: #{odefunc_forward.1} parent=0 // pred_check
    _
  $region7: #{odefunc_forward.1} parent=0 // pred_check_branch
    %15 = sbr.rel (0) target = $region9
  $region8: #{odefunc_forward.1} parent=0 // pred_region
    _
  $region9: #{odefunc_forward.1} parent=0 // pred_fallthru
    _
  // Predicated region
  $region10: #{odefunc_forward.1} parent=0 // pred_check
    _
  $region11: #{odefunc_forward.1} parent=0 // pred_check_branch
    %17 = sbr.rel (0) target = $region13
  $region12: #{odefunc_forward.1} parent=0 // pred_region
    _
  $region13: #{odefunc_forward.1} parent=0 // pred_fallthru
    _
  // Predicated region
  $region14: #{odefunc_forward.1} parent=0 // pred_check
    _
  $region15: #{odefunc_forward.1} parent=0 // pred_check_branch
    %19 = sbr.rel (0) target = $region17
  $region16: #{odefunc_forward.1} parent=0 // pred_region
    _
  $region17: #{odefunc_forward.1} parent=0 // pred_fallthru
    _
  // Predicated region
  $region18: #{odefunc_forward.1} parent=0 // pred_check
    _
  $region19: #{odefunc_forward.1} parent=0 // pred_check_branch
    %21 = sbr.rel (0) target = $region21
  $region20: #{odefunc_forward.1} parent=0 // pred_region
    _
  $region21: #{odefunc_forward.1} parent=0 // pred_fallthru
    _
  // Predicated region
  $region22: #{odefunc_forward.1} parent=0 // pred_check
    _
  $region23: #{odefunc_forward.1} parent=0 // pred_check_branch
    %23 = sbr.rel (0) target = $region25
  $region24: #{odefunc_forward.1} parent=0 // pred_region
    _
  $region25: #{odefunc_forward.1} parent=0 // pred_fallthru
    _
  // Predicated region
  $region26: #{odefunc_forward.1} parent=0 // pred_check
    _
  $region27: #{odefunc_forward.1} parent=0 // pred_check_branch
    %25 = sbr.rel (0) target = $region29
  $region28: #{odefunc_forward.1} parent=0 // pred_region
    _
  $region29: #{odefunc_forward.1} parent=0 // pred_fallthru
    _
  %v26 = vld [vmem:[%s2] sm:$0xff]
  %v27 = vld [vmem:[%s2 + $0x8] sm:$0xff]
  %v28 = vld [vmem:[%s2 + $0x10] sm:$0xff]
  %v29 = vld [vmem:[%s2 + $0x18] sm:$0xff]
  %v30 = vld [vmem:[%s2 + $0x20] sm:$0xff]
  %v31 = vld [vmem:[%s2 + $0x28] sm:$0xff]
  %v32 = vld [vmem:[%s2 + $0x30] sm:$0xff]
  %v33 = vld [vmem:[%s2 + $0x38] sm:$0xff]
  %v34 = vld [vmem:[%s4] sm:$0xff]
  %v35 = vld [vmem:[%s4 + $0x8] sm:$0xff]
  %v36 = vld [vmem:[%s4 + $0x10] sm:$0xff]
  %v37 = vld [vmem:[%s4 + $0x18] sm:$0xff]
  %v38 = vld [vmem:[%s4 + $0x20] sm:$0xff]
  %v39 = vld [vmem:[%s4 + $0x28] sm:$0xff]
  %v40 = vld [vmem:[%s4 + $0x30] sm:$0xff]
  %v41 = vld [vmem:[%s4 + $0x38] sm:$0xff]
  %v42 = vld [vmem:[%s6] sm:$0xf]
  %44 = vset.pattern.permute.xlu0 0
  %45 = vperm.xlu0 %44, %v26
  %v46 = vpop.permute.xlu0 %45
  %49 = vset.pattern.permute.xlu0 0
  %50 = vperm.xlu0 %49, %v27
  %v51 = vpop.permute.xlu0 %50
  %54 = vset.pattern.permute.xlu0 0
  %55 = vperm.xlu0 %54, %v28
  %v56 = vpop.permute.xlu0 %55
  %59 = vset.pattern.permute.xlu0 0
  %60 = vperm.xlu0 %59, %v29
  %v61 = vpop.permute.xlu0 %60
  %64 = vset.pattern.permute.xlu0 0
  %65 = vperm.xlu0 %64, %v30
  %v66 = vpop.permute.xlu0 %65
  %69 = vset.pattern.permute.xlu0 0
  %70 = vperm.xlu0 %69, %v31
  %v71 = vpop.permute.xlu0 %70
  %74 = vset.pattern.permute.xlu0 0
  %75 = vperm.xlu0 %74, %v32
  %v76 = vpop.permute.xlu0 %75
  %79 = vset.pattern.permute.xlu0 0
  %80 = vperm.xlu0 %79, %v33
  %v81 = vpop.permute.xlu0 %80
  %84 = vset.pattern.permute.xlu0 0
  %85 = vperm.xlu0 %84, %v34
  %v86 = vpop.permute.xlu0 %85
  %89 = vset.pattern.permute.xlu0 0
  %90 = vperm.xlu0 %89, %v35
  %v91 = vpop.permute.xlu0 %90
  %94 = vset.pattern.permute.xlu0 0
  %95 = vperm.xlu0 %94, %v36
  %v96 = vpop.permute.xlu0 %95
  %99 = vset.pattern.permute.xlu0 0
  %100 = vperm.xlu0 %99, %v37
  %v101 = vpop.permute.xlu0 %100
  %104 = vset.pattern.permute.xlu0 0
  %105 = vperm.xlu0 %104, %v38
  %v106 = vpop.permute.xlu0 %105
  %109 = vset.pattern.permute.xlu0 0
  %110 = vperm.xlu0 %109, %v39
  %v111 = vpop.permute.xlu0 %110
  %114 = vset.pattern.permute.xlu0 0
  %115 = vperm.xlu0 %114, %v40
  %v116 = vpop.permute.xlu0 %115
  %119 = vset.pattern.permute.xlu0 0
  %120 = vperm.xlu0 %119, %v41
  %v121 = vpop.permute.xlu0 %120
  %124 = vset.pattern.permute.xlu0 0
  %125 = vperm.xlu0 %124, %v42
  %v126 = vpop.permute.xlu0 %125
  %v128 = vld [vmem:[%s0] sm:$0xf]
  %v129 = vld [vmem:[%s1] sm:$0xff]
  %v130 = vld [vmem:[%s1 + $0x8] sm:$0xff]
  %v131 = vld [vmem:[%s1 + $0x10] sm:$0xff]
  %v132 = vld [vmem:[%s1 + $0x18] sm:$0xff]
  %v133 = vld [vmem:[%s1 + $0x20] sm:$0xff]
  %v134 = vld [vmem:[%s1 + $0x28] sm:$0xff]
  %v135 = vld [vmem:[%s1 + $0x30] sm:$0xff]
  %v136 = vld [vmem:[%s1 + $0x38] sm:$0xff]
  %v137 = vld [vmem:[%s3] sm:$0xff]
  %v138 = vld [vmem:[%s3 + $0x8] sm:$0xff]
  %v139 = vld [vmem:[%s3 + $0x10] sm:$0xff]
  %v140 = vld [vmem:[%s3 + $0x18] sm:$0xff]
  %v141 = vld [vmem:[%s3 + $0x20] sm:$0xff]
  %v142 = vld [vmem:[%s3 + $0x28] sm:$0xff]
  %v143 = vld [vmem:[%s3 + $0x30] sm:$0xff]
  %v144 = vld [vmem:[%s3 + $0x38] sm:$0xff]
  %v145 = vld [vmem:[%s5] sm:$0xf]
  %vm146 = vcmask 31744
  %v148 = vsel %vm146, %v129, 0
  %v151 = vsel %vm146, %v130, 0
  %v154 = vsel %vm146, %v131, 0
  %v157 = vsel %vm146, %v132, 0
  %v160 = vsel %vm146, %v133, 0
  %v163 = vsel %vm146, %v134, 0
  %v166 = vsel %vm146, %v135, 0
  %v169 = vsel %vm146, %v136, 0
  %vm171 = vcmask 1043456
  %v173 = vsel %vm171, %v128, 0
  %175 = vmatprep.subr.mxu0 0.0
  %176 = vmatpush1.msra.mxu0 0.0
  %177 = vmatprep.subr.mxu0 0.0
  %178 = vmatpush1.msra.mxu0 0.0
  %179 = vmatprep.subr.mxu0 0.0
  %180 = vmatpush1.msra.mxu0 0.0
  %181 = vmatprep.subr.mxu0 0.0
  %182 = vmatpush1.msra.mxu0 0.0
  %183 = vmatprep.subr.mxu0 0.0
  %184 = vmatpush1.msra.mxu0 0.0
  %185 = vmatprep.subr.mxu0 0.0
  %186 = vmatpush1.msra.mxu0 0.0
  %187 = vmatprep.subr.mxu0 0.0
  %188 = vmatpush1.msra.mxu0 0.0
  %189 = vmatprep.subr.mxu0 0.0
  %190 = vmatpush1.msra.mxu0 0.0
  %191 = vmatprep.subr.mxu0 0.0
  %192 = vmatpush1.msra.mxu0 0.0
  %193 = vmatprep.subr.mxu0 0.0
  %194 = vmatpush1.msra.mxu0 0.0
  %195 = vmatprep.subr.mxu0 0.0
  %196 = vmatpush1.msra.mxu0 0.0
  %197 = vmatprep.subr.mxu0 0.0
  %198 = vmatpush1.msra.mxu0 0.0
  %199 = vmatprep.subr.mxu0 0.0
  %200 = vmatpush1.msra.mxu0 0.0
  %201 = vmatprep.subr.mxu0 0.0
  %202 = vmatpush1.msra.mxu0 0.0
  %203 = vmatprep.subr.mxu0 0.0
  %204 = vmatpush1.msra.mxu0 0.0
  %205 = vmatprep.subr.mxu0 0.0
  %206 = vmatpush1.msra.mxu0 %v173
  %207 = vmatprep.subr.mxu0 0.0
  %208 = vmatpush2.msra.mxu0 0.0
  %209 = vmatprep.subr.mxu0 0.0
  %210 = vmatpush2.msra.mxu0 0.0
  %211 = vmatprep.subr.mxu0 0.0
  %212 = vmatpush2.msra.mxu0 0.0
  %213 = vmatprep.subr.mxu0 0.0
  %214 = vmatpush2.msra.mxu0 0.0
  %215 = vmatprep.subr.mxu0 0.0
  %216 = vmatpush2.msra.mxu0 0.0
  %217 = vmatprep.subr.mxu0 0.0
  %218 = vmatpush2.msra.mxu0 0.0
  %219 = vmatprep.subr.mxu0 0.0
  %220 = vmatpush2.msra.mxu0 0.0
  %221 = vmatprep.subr.mxu0 0.0
  %222 = vmatpush2.msra.mxu0 0.0
  %223 = vmatprep.subr.mxu0 0.0
  %224 = vmatpush2.msra.mxu0 0.0
  %225 = vmatprep.subr.mxu0 0.0
  %226 = vmatpush2.msra.mxu0 0.0
  %227 = vmatprep.subr.mxu0 0.0
  %228 = vmatpush2.msra.mxu0 0.0
  %229 = vmatprep.subr.mxu0 0.0
  %230 = vmatpush2.msra.mxu0 0.0
  %231 = vmatprep.subr.mxu0 0.0
  %232 = vmatpush2.msra.mxu0 0.0
  %233 = vmatprep.subr.mxu0 0.0
  %234 = vmatpush2.msra.mxu0 0.0
  %235 = vmatprep.subr.mxu0 0.0
  %236 = vmatpush2.msra.mxu0 0.0
  %237 = vmatprep.subr.mxu0 0.0
  %238 = vmatpush2.msra.mxu0 0.0
  %239 = vmatprep.mubr.f32.mxu0 0.0
  %240 = vmatmul.mubr.f32.gmra.mxu0 %v148
  %v241 = vpop.f32.mrf.mxu0
  %v242 = vadd.f32 %v46, %v241
  %v243 = vpop.f32.mrf.mxu0
  %244 = vmatprep.mubr.f32.mxu0 0.0
  %245 = vmatmul.mubr.f32.gmra.mxu0 %v151
  %v246 = vpop.f32.mrf.mxu0
  %v247 = vadd.f32 %v51, %v246
  %v248 = vpop.f32.mrf.mxu0
  %249 = vmatprep.mubr.f32.mxu0 0.0
  %250 = vmatmul.mubr.f32.gmra.mxu0 %v154
  %v251 = vpop.f32.mrf.mxu0
  %v252 = vadd.f32 %v56, %v251
  %v253 = vpop.f32.mrf.mxu0
  %254 = vmatprep.mubr.f32.mxu0 0.0
  %255 = vmatmul.mubr.f32.gmra.mxu0 %v157
  %v256 = vpop.f32.mrf.mxu0
  %v257 = vadd.f32 %v61, %v256
  %v258 = vpop.f32.mrf.mxu0
  %259 = vmatprep.mubr.f32.mxu0 0.0
  %260 = vmatmul.mubr.f32.gmra.mxu0 %v160
  %v261 = vpop.f32.mrf.mxu0
  %v262 = vadd.f32 %v66, %v261
  %v263 = vpop.f32.mrf.mxu0
  %264 = vmatprep.mubr.f32.mxu0 0.0
  %265 = vmatmul.mubr.f32.gmra.mxu0 %v163
  %v266 = vpop.f32.mrf.mxu0
  %v267 = vadd.f32 %v71, %v266
  %v268 = vpop.f32.mrf.mxu0
  %269 = vmatprep.mubr.f32.mxu0 0.0
  %270 = vmatmul.mubr.f32.gmra.mxu0 %v166
  %v271 = vpop.f32.mrf.mxu0
  %v272 = vadd.f32 %v76, %v271
  %v273 = vpop.f32.mrf.mxu0
  %274 = vmatprep.mubr.f32.mxu0 0.0
  %275 = vmatmul.mubr.f32.gmra.mxu0 %v169
  %v276 = vpop.f32.mrf.mxu0
  %v277 = vadd.f32 %v81, %v276
  %v278 = vpop.f32.mrf.mxu0
  %279 = vdwg.mxu0
  %v280 = vtanh.pop %v242
  %v281 = vtanh.pop %v247
  %v282 = vtanh.pop %v252
  %v283 = vtanh.pop %v257
  %v284 = vtanh.pop %v262
  %v285 = vtanh.pop %v267
  %v286 = vtanh.pop %v272
  %v287 = vtanh.pop %v277
  %vm288 = vcmask 523264
  %v290 = vsel %vm288, %v137, 0
  %v293 = vsel %vm288, %v138, 0
  %v296 = vsel %vm288, %v139, 0
  %v299 = vsel %vm288, %v140, 0
  %v302 = vsel %vm288, %v141, 0
  %v305 = vsel %vm288, %v142, 0
  %v308 = vsel %vm288, %v143, 0
  %v311 = vsel %vm288, %v144, 0
  %313 = vmatprep.subr.mxu0 0.0
  %314 = vmatpush1.msra.mxu0 0.0
  %315 = vmatprep.subr.mxu0 0.0
  %316 = vmatpush1.msra.mxu0 0.0
  %317 = vmatprep.subr.mxu0 0.0
  %318 = vmatpush1.msra.mxu0 0.0
  %319 = vmatprep.subr.mxu0 0.0
  %320 = vmatpush1.msra.mxu0 0.0
  %321 = vmatprep.subr.mxu0 0.0
  %322 = vmatpush1.msra.mxu0 0.0
  %323 = vmatprep.subr.mxu0 0.0
  %324 = vmatpush1.msra.mxu0 0.0
  %325 = vmatprep.subr.mxu0 0.0
  %326 = vmatpush1.msra.mxu0 0.0
  %327 = vmatprep.subr.mxu0 0.0
  %328 = vmatpush1.msra.mxu0 0.0
  %329 = vmatprep.subr.mxu0 0.0
  %330 = vmatpush1.msra.mxu0 %v287
  %331 = vmatprep.subr.mxu0 0.0
  %332 = vmatpush1.msra.mxu0 %v286
  %333 = vmatprep.subr.mxu0 0.0
  %334 = vmatpush1.msra.mxu0 %v285
  %335 = vmatprep.subr.mxu0 0.0
  %336 = vmatpush1.msra.mxu0 %v284
  %337 = vmatprep.subr.mxu0 0.0
  %338 = vmatpush1.msra.mxu0 %v283
  %339 = vmatprep.subr.mxu0 0.0
  %340 = vmatpush1.msra.mxu0 %v282
  %341 = vmatprep.subr.mxu0 0.0
  %342 = vmatpush1.msra.mxu0 %v281
  %343 = vmatprep.subr.mxu0 0.0
  %344 = vmatpush1.msra.mxu0 %v280
  %345 = vmatprep.subr.mxu0 0.0
  %346 = vmatpush2.msra.mxu0 0.0
  %347 = vmatprep.subr.mxu0 0.0
  %348 = vmatpush2.msra.mxu0 0.0
  %349 = vmatprep.subr.mxu0 0.0
  %350 = vmatpush2.msra.mxu0 0.0
  %351 = vmatprep.subr.mxu0 0.0
  %352 = vmatpush2.msra.mxu0 0.0
  %353 = vmatprep.subr.mxu0 0.0
  %354 = vmatpush2.msra.mxu0 0.0
  %355 = vmatprep.subr.mxu0 0.0
  %356 = vmatpush2.msra.mxu0 0.0
  %357 = vmatprep.subr.mxu0 0.0
  %358 = vmatpush2.msra.mxu0 0.0
  %359 = vmatprep.subr.mxu0 0.0
  %360 = vmatpush2.msra.mxu0 0.0
  %361 = vmatprep.subr.mxu0 0.0
  %362 = vmatpush2.msra.mxu0 0.0
  %363 = vmatprep.subr.mxu0 0.0
  %364 = vmatpush2.msra.mxu0 0.0
  %365 = vmatprep.subr.mxu0 0.0
  %366 = vmatpush2.msra.mxu0 0.0
  %367 = vmatprep.subr.mxu0 0.0
  %368 = vmatpush2.msra.mxu0 0.0
  %369 = vmatprep.subr.mxu0 0.0
  %370 = vmatpush2.msra.mxu0 0.0
  %371 = vmatprep.subr.mxu0 0.0
  %372 = vmatpush2.msra.mxu0 0.0
  %373 = vmatprep.subr.mxu0 0.0
  %374 = vmatpush2.msra.mxu0 0.0
  %375 = vmatprep.subr.mxu0 0.0
  %376 = vmatpush2.msra.mxu0 0.0
  %377 = vmatprep.mubr.f32.mxu0 0.0
  %378 = vmatmul.mubr.f32.gmra.mxu0 %v290
  %v379 = vpop.f32.mrf.mxu0
  %v380 = vadd.f32 %v86, %v379
  %v381 = vpop.f32.mrf.mxu0
  %382 = vmatprep.mubr.f32.mxu0 0.0
  %383 = vmatmul.mubr.f32.gmra.mxu0 %v293
  %v384 = vpop.f32.mrf.mxu0
  %v385 = vadd.f32 %v91, %v384
  %v386 = vpop.f32.mrf.mxu0
  %387 = vmatprep.mubr.f32.mxu0 0.0
  %388 = vmatmul.mubr.f32.gmra.mxu0 %v296
  %v389 = vpop.f32.mrf.mxu0
  %v390 = vadd.f32 %v96, %v389
  %v391 = vpop.f32.mrf.mxu0
  %392 = vmatprep.mubr.f32.mxu0 0.0
  %393 = vmatmul.mubr.f32.gmra.mxu0 %v299
  %v394 = vpop.f32.mrf.mxu0
  %v395 = vadd.f32 %v101, %v394
  %v396 = vpop.f32.mrf.mxu0
  %397 = vmatprep.mubr.f32.mxu0 0.0
  %398 = vmatmul.mubr.f32.gmra.mxu0 %v302
  %v399 = vpop.f32.mrf.mxu0
  %v400 = vadd.f32 %v106, %v399
  %v401 = vpop.f32.mrf.mxu0
  %402 = vmatprep.mubr.f32.mxu0 0.0
  %403 = vmatmul.mubr.f32.gmra.mxu0 %v305
  %v404 = vpop.f32.mrf.mxu0
  %v405 = vadd.f32 %v111, %v404
  %v406 = vpop.f32.mrf.mxu0
  %407 = vmatprep.mubr.f32.mxu0 0.0
  %408 = vmatmul.mubr.f32.gmra.mxu0 %v308
  %v409 = vpop.f32.mrf.mxu0
  %v410 = vadd.f32 %v116, %v409
  %v411 = vpop.f32.mrf.mxu0
  %412 = vmatprep.mubr.f32.mxu0 0.0
  %413 = vmatmul.mubr.f32.gmra.mxu0 %v311
  %v414 = vpop.f32.mrf.mxu0
  %v415 = vadd.f32 %v121, %v414
  %v416 = vpop.f32.mrf.mxu0
  %417 = vdwg.mxu0
  %v418 = vtanh.pop %v380
  %v419 = vtanh.pop %v385
  %v420 = vtanh.pop %v390
  %v421 = vtanh.pop %v395
  %v422 = vtanh.pop %v400
  %v423 = vtanh.pop %v405
  %v424 = vtanh.pop %v410
  %v425 = vtanh.pop %v415
  %v427 = vsel %vm288, %v145, 0
  %429 = vmatprep.subr.mxu0 0.0
  %430 = vmatpush1.msra.mxu0 0.0
  %431 = vmatprep.subr.mxu0 0.0
  %432 = vmatpush1.msra.mxu0 0.0
  %433 = vmatprep.subr.mxu0 0.0
  %434 = vmatpush1.msra.mxu0 0.0
  %435 = vmatprep.subr.mxu0 0.0
  %436 = vmatpush1.msra.mxu0 0.0
  %437 = vmatprep.subr.mxu0 0.0
  %438 = vmatpush1.msra.mxu0 0.0
  %439 = vmatprep.subr.mxu0 0.0
  %440 = vmatpush1.msra.mxu0 0.0
  %441 = vmatprep.subr.mxu0 0.0
  %442 = vmatpush1.msra.mxu0 0.0
  %443 = vmatprep.subr.mxu0 0.0
  %444 = vmatpush1.msra.mxu0 0.0
  %445 = vmatprep.subr.mxu0 0.0
  %446 = vmatpush1.msra.mxu0 %v425
  %447 = vmatprep.subr.mxu0 0.0
  %448 = vmatpush1.msra.mxu0 %v424
  %449 = vmatprep.subr.mxu0 0.0
  %450 = vmatpush1.msra.mxu0 %v423
  %451 = vmatprep.subr.mxu0 0.0
  %452 = vmatpush1.msra.mxu0 %v422
  %453 = vmatprep.subr.mxu0 0.0
  %454 = vmatpush1.msra.mxu0 %v421
  %455 = vmatprep.subr.mxu0 0.0
  %456 = vmatpush1.msra.mxu0 %v420
  %457 = vmatprep.subr.mxu0 0.0
  %458 = vmatpush1.msra.mxu0 %v419
  %459 = vmatprep.subr.mxu0 0.0
  %460 = vmatpush1.msra.mxu0 %v418
  %461 = vmatprep.subr.mxu0 0.0
  %462 = vmatpush2.msra.mxu0 0.0
  %463 = vmatprep.subr.mxu0 0.0
  %464 = vmatpush2.msra.mxu0 0.0
  %465 = vmatprep.subr.mxu0 0.0
  %466 = vmatpush2.msra.mxu0 0.0
  %467 = vmatprep.subr.mxu0 0.0
  %468 = vmatpush2.msra.mxu0 0.0
  %469 = vmatprep.subr.mxu0 0.0
  %470 = vmatpush2.msra.mxu0 0.0
  %471 = vmatprep.subr.mxu0 0.0
  %472 = vmatpush2.msra.mxu0 0.0
  %473 = vmatprep.subr.mxu0 0.0
  %474 = vmatpush2.msra.mxu0 0.0
  %475 = vmatprep.subr.mxu0 0.0
  %476 = vmatpush2.msra.mxu0 0.0
  %477 = vmatprep.subr.mxu0 0.0
  %478 = vmatpush2.msra.mxu0 0.0
  %479 = vmatprep.subr.mxu0 0.0
  %480 = vmatpush2.msra.mxu0 0.0
  %481 = vmatprep.subr.mxu0 0.0
  %482 = vmatpush2.msra.mxu0 0.0
  %483 = vmatprep.subr.mxu0 0.0
  %484 = vmatpush2.msra.mxu0 0.0
  %485 = vmatprep.subr.mxu0 0.0
  %486 = vmatpush2.msra.mxu0 0.0
  %487 = vmatprep.subr.mxu0 0.0
  %488 = vmatpush2.msra.mxu0 0.0
  %489 = vmatprep.subr.mxu0 0.0
  %490 = vmatpush2.msra.mxu0 0.0
  %491 = vmatprep.subr.mxu0 0.0
  %492 = vmatpush2.msra.mxu0 0.0
  %493 = vmatprep.mubr.f32.mxu0 0.0
  %494 = vmatmul.mubr.f32.gmra.mxu0 %v427
  %v495 = vpop.f32.mrf.mxu0
  %v496 = vadd.f32 %v126, %v495
  %v497 = vpop.f32.mrf.mxu0
  %498 = vdwg.mxu0
  %499 = vst [vmem:[%s7] sm:$0xf] %v496
  // Predicated region
  $region30: #{odefunc_forward.1} parent=0 // pred_check
    _
  $region31: #{odefunc_forward.1} parent=0 // pred_check_branch
    %501 = sbr.rel (0) target = $region33
  $region32: #{odefunc_forward.1} parent=0 // pred_region
    _
  $region33: #{odefunc_forward.1} parent=0 // pred_fallthru
    _
  // Predicated region
  $region34: #{odefunc_forward.1} parent=0 // pred_check
    _
  $region35: #{odefunc_forward.1} parent=0 // pred_check_branch
    %503 = sbr.rel (0) target = $region37
  $region36: #{odefunc_forward.1} parent=0 // pred_region
    _
  $region37: #{odefunc_forward.1} parent=0 // pred_fallthru
    _

</llo_original>
